<compile_context>
chip_gen: v7x
topology: tpu7x:2x2x1
jax: 0.10.0
libtpu: 0.0.40
codegen_flags: <defaults>
</compile_context>

<pallas_src>
import functools

import jax
import jax.numpy as jnp
from jax.experimental import pallas as pl
from jax.experimental.pallas import tpu as pltpu

LEAKY_SLOPE = 0.01           # torch.nn.functional.leaky_relu default negative_slope
_LANE = 128                  # feature dims padded to a multiple of this
_SUBLANE = 8                 # batch padded to a multiple of this
_DEFAULT_BLOCK_M = 512       # batch-tile target (v5e/v6e); shrunk to fit v7x VMEM
_STREAM_LAYER_THRESHOLD = 8  # deep MLPs use the layer-streaming path
_HEADROOM_BYTES = 2 << 20


def _round_up(x, m):
    return ((x + m - 1) // m) * m


def _vmem_budget_bytes():
    """~80% of per-core VMEM capacity (128 MiB v5e/v6e, 64 MiB per TC v7x)."""
    try:
        cap = int(pltpu.get_tpu_info().vmem_capacity_bytes)
    except Exception:
        cap = 64 << 20  # conservative (v7x-safe) fallback
    return int(cap * 0.80)


# --------------------------------------------------------------------------- #
# Kernels
# --------------------------------------------------------------------------- #
def _resident_mlp_kernel(*refs, num_layers, use_bf16):
    """Whole MLP for one batch tile; every layer's weights resident in VMEM."""
    x_ref = refs[0]
    w_refs = refs[1:1 + num_layers]
    b_refs = refs[1 + num_layers:1 + 2 * num_layers]
    o_ref = refs[1 + 2 * num_layers]

    h = x_ref[...]                                   # (tm, dpad_0) f32
    if use_bf16:
        h = h.astype(jnp.bfloat16)                   # weights are already bf16 in HBM
    for l in range(num_layers):                      # static unroll (deep L -> streaming path)
        y = jnp.dot(h, w_refs[l][...], preferred_element_type=jnp.float32)
        y = y + b_refs[l][...]                       # f32 epilogue, (1, npad) broadcast
        if l < num_layers - 1:
            y = jnp.where(y > 0, y, LEAKY_SLOPE * y)  # leaky_relu
            h = y.astype(jnp.bfloat16) if use_bf16 else y
        else:
            o_ref[...] = y.astype(o_ref.dtype)        # lane-dense store (npad % 128 == 0)


def _streaming_mlp_kernel(x_ref, w_ref, b_ref, o_ref, h_ref):
    """One (batch-tile, layer) grid step; weights streamed one layer at a time,
    activation kept in a persistent VMEM scratch across the layer axis."""
    l = pl.program_id(1)
    is_last = l == pl.num_programs(1) - 1

    @pl.when(l == 0)
    def _():
        h_ref[...] = x_ref[...].astype(h_ref.dtype)

    y = jnp.dot(h_ref[...], w_ref[0], preferred_element_type=jnp.float32)
    y = y + b_ref[0]
    y = jnp.where(is_last, y, jnp.where(y > 0, y, LEAKY_SLOPE * y))
    h_ref[...] = y.astype(h_ref.dtype)

    @pl.when(is_last)
    def _():
        o_ref[...] = y.astype(o_ref.dtype)


# --------------------------------------------------------------------------- #
# VMEM estimates (include activation intermediates + headroom)
# --------------------------------------------------------------------------- #
def _resident_vmem_estimate(tm, d_pads, w_itemsize, weight_bufs):
    L = len(d_pads) - 1
    io_tiles = 2 * tm * d_pads[0] * 4 + 2 * tm * d_pads[-1] * 4   # double-buffered x / out
    weights = weight_bufs * sum(d_pads[i] * d_pads[i + 1] for i in range(L)) * w_itemsize
    biases = weight_bufs * sum(d_pads[1:]) * 4
    interm = 3 * tm * max(d_pads) * 4                              # h / y / cast temporaries
    return io_tiles + weights + biases + interm + _HEADROOM_BYTES


def _streaming_vmem_estimate(tm, d_max, w_itemsize, h_itemsize):
    io_tiles = 2 * tm * d_max * 4 + 2 * tm * d_max * 4
    weights = 2 * d_max * d_max * w_itemsize + 2 * d_max * 4      # double-buffered 1 layer
    scratch = tm * d_max * h_itemsize + 3 * tm * d_max * 4
    return io_tiles + weights + scratch + _HEADROOM_BYTES


# --------------------------------------------------------------------------- #
# pallas_call wrappers
# --------------------------------------------------------------------------- #
def _resident_call(x_pad, w_padded, b_padded, tm, out_dpad, vmem_bytes, use_bf16,
                   single_buffer_weights):
    b_pad, d0 = x_pad.shape
    L = len(w_padded)
    grid = (b_pad // tm,)

    const_kw = dict(pipeline_mode=pl.Buffered(1)) if single_buffer_weights else {}
    in_specs = [pl.BlockSpec((tm, d0), lambda i: (i, 0))]
    in_specs += [pl.BlockSpec(w.shape, lambda i: (0, 0), **const_kw) for w in w_padded]
    in_specs += [pl.BlockSpec(b.shape, lambda i: (0, 0), **const_kw) for b in b_padded]

    kernel = functools.partial(_resident_mlp_kernel, num_layers=L, use_bf16=use_bf16)
    return pl.pallas_call(
        kernel,
        out_shape=jax.ShapeDtypeStruct((b_pad, out_dpad), jnp.float32),
        grid=grid,
        in_specs=in_specs,
        out_specs=pl.BlockSpec((tm, out_dpad), lambda i: (i, 0)),
        compiler_params=pltpu.CompilerParams(
            dimension_semantics=("parallel",),   # batch tiles independent -> megacore
            vmem_limit_bytes=vmem_bytes,
        ),
    )(x_pad, *w_padded, *b_padded)


def _streaming_call(x_pad, w_stack, b_stack, tm, vmem_bytes, use_bf16):
    b_pad, d_max = x_pad.shape
    L = w_stack.shape[0]
    grid = (b_pad // tm, L)
    h_dtype = jnp.bfloat16 if use_bf16 else jnp.float32

    return pl.pallas_call(
        _streaming_mlp_kernel,
        out_shape=jax.ShapeDtypeStruct((b_pad, d_max), jnp.float32),
        grid=grid,
        in_specs=[
            pl.BlockSpec((tm, d_max), lambda i, l: (i, 0)),
            pl.BlockSpec((1, d_max, d_max), lambda i, l: (l, 0, 0)),   # stream layer l
            pl.BlockSpec((1, 1, d_max), lambda i, l: (l, 0, 0)),
        ],
        out_specs=pl.BlockSpec((tm, d_max), lambda i, l: (i, 0)),
        scratch_shapes=[pltpu.VMEM((tm, d_max), h_dtype)],             # persistent activation
        compiler_params=pltpu.CompilerParams(
            dimension_semantics=("parallel", "arbitrary"),
            vmem_limit_bytes=vmem_bytes,
        ),
    )(x_pad, w_stack, b_stack)


# --------------------------------------------------------------------------- #
# Module
# --------------------------------------------------------------------------- #
class MLPPallas:
    """Mirror of the PyTorch MLP: Linear layers, leaky_relu between them,
    no output activation (output_activation=None default)."""

    def __init__(self, input_dim, hidden_sizes, key, use_bf16_matmul=True):
        dims = [input_dim] + list(hidden_sizes)
        self.dims = dims
        self.num_layers = len(dims) - 1
        self.out_dim = dims[-1]
        self.use_bf16 = use_bf16_matmul
        self.d_pads = [_round_up(d, _LANE) for d in dims]   # per-layer padded widths
        w_dtype = jnp.bfloat16 if use_bf16_matmul else jnp.float32

        self.weights_t = []   # unpadded (in, out) f32 (for the reference)
        self.biases = []      # unpadded (out,)  f32
        self.w_padded = []    # per-layer (kpad, npad) in kernel dtype
        self.b_padded = []    # per-layer (1, npad) f32
        for i in range(self.num_layers):
            fan_in, fan_out = dims[i], dims[i + 1]
            key, kw, kb = jax.random.split(key, 3)
            bound = 1.0 / (fan_in ** 0.5)   # ~ nn.Linear U(-1/sqrt(fan_in), +)
            w = jax.random.uniform(kw, (fan_out, fan_in), jnp.float32, -bound, bound)
            b = jax.random.uniform(kb, (fan_out,), jnp.float32, -bound, bound)
            w_t = w.T
            self.weights_t.append(w_t)
            self.biases.append(b)
            kp, np_ = self.d_pads[i], self.d_pads[i + 1]
            wp = jnp.zeros((kp, np_), jnp.float32).at[:fan_in, :fan_out].set(w_t)
            self.w_padded.append(wp.astype(w_dtype))
            self.b_padded.append(jnp.zeros((1, np_), jnp.float32).at[0, :fan_out].set(b))

        self._w_stack = None   # uniform-width stacks, built lazily for layer streaming
        self._b_stack = None

    def _uniform_stacks(self):
        if self._w_stack is None:
            d_max = max(self.d_pads)
            w_dtype = jnp.bfloat16 if self.use_bf16 else jnp.float32
            w_stack = jnp.zeros((self.num_layers, d_max, d_max), w_dtype)
            b_stack = jnp.zeros((self.num_layers, 1, d_max), jnp.float32)
            for l in range(self.num_layers):
                kp, np_ = self.d_pads[l], self.d_pads[l + 1]
                w_stack = w_stack.at[l, :kp, :np_].set(self.w_padded[l].astype(w_dtype))
                b_stack = b_stack.at[l, 0, :np_].set(self.b_padded[l][0])
            self._w_stack, self._b_stack = w_stack, b_stack
        return self._w_stack, self._b_stack

    def __call__(self, x, force_streaming=False, block_m=_DEFAULT_BLOCK_M):
        B, Din = x.shape
        assert Din == self.dims[0]
        w_itemsize = 2 if self.use_bf16 else 4
        h_itemsize = 2 if self.use_bf16 else 4
        budget = _vmem_budget_bytes()

        # Batch tiling: at least 2 tiles when possible so both v7x TCs get work.
        b0 = _round_up(max(B, 1), _SUBLANE)
        if b0 >= 2 * _SUBLANE:
            tm = min(block_m, _round_up((b0 + 1) // 2, _SUBLANE))
        else:
            tm = b0

        use_streaming = force_streaming or self.num_layers >= _STREAM_LAYER_THRESHOLD
        if not use_streaming:
            while (_resident_vmem_estimate(tm, self.d_pads, w_itemsize, 1) > budget
                   and tm > _SUBLANE):
                tm = max(_SUBLANE, _round_up(tm // 2, _SUBLANE))
            if _resident_vmem_estimate(tm, self.d_pads, w_itemsize, 1) > budget:
                use_streaming = True   # resident weight stack doesn't fit -> stream per layer

        d_max = max(self.d_pads)
        if use_streaming:
            while (_streaming_vmem_estimate(tm, d_max, w_itemsize, h_itemsize) > budget
                   and tm > _SUBLANE):
                tm = max(_SUBLANE, _round_up(tm // 2, _SUBLANE))
            if _streaming_vmem_estimate(tm, d_max, w_itemsize, h_itemsize) > budget:
                # TODO(synk): add K/N tiling of each layer's matmul for layers too wide
                # to fit even one double-buffered weight block in VMEM.
                raise ValueError("MLP layer too wide for available VMEM")

        b_pad = _round_up(b0, tm)
        feat = d_max if use_streaming else self.d_pads[0]
        # Zero-padded features stay exactly zero through every layer (weight/bias
        # padding is zero and leaky_relu(0) == 0), so the slice below is exact.
        x_pad = jnp.zeros((b_pad, feat), jnp.float32).at[:B, :Din].set(
            x.astype(jnp.float32))
        vmem_bytes = int(budget)

        if use_streaming:
            w_stack, b_stack = self._uniform_stacks()
            out_pad = _streaming_call(x_pad, w_stack, b_stack, tm, vmem_bytes,
                                      self.use_bf16)
        else:
            try:
                out_pad = _resident_call(x_pad, self.w_padded, self.b_padded, tm,
                                         self.d_pads[-1], vmem_bytes, self.use_bf16,
                                         single_buffer_weights=True)
                out_pad = jax.block_until_ready(out_pad)
            except Exception:
                # pl.Buffered(1) on constant-index operands not supported by this
                # jax build -> fall back to default double-buffered weight specs.
                out_pad = _resident_call(x_pad, self.w_padded, self.b_padded, tm,
                                         self.d_pads[-1], vmem_bytes, self.use_bf16,
                                         single_buffer_weights=False)

        return out_pad[:B, :self.out_dim]


def _reference(x, mlp):
    """Pure-JAX reference (unpadded, f32) for correctness check."""
    n = len(mlp.weights_t)
    h = x
    for i, (w_t, b) in enumerate(zip(mlp.weights_t, mlp.biases)):
        h = h @ w_t + b
        if i < n - 1:
            h = jnp.where(h > 0, h, LEAKY_SLOPE * h)
    return h


if __name__ == "__main__":
    key = jax.random.PRNGKey(0)
    key, kx, kp = jax.random.split(key, 3)

    batch = 8
    input_dim = 16
    hidden_sizes = (32, 32, 4)

    x = jax.random.normal(kx, (batch, input_dim), jnp.float32)

    # f32 path (strict tolerance) on the resident-weight kernel.
    mlp_f32 = MLPPallas(input_dim, hidden_sizes, kp, use_bf16_matmul=False)
    ref = _reference(x, mlp_f32)

    out = jax.block_until_ready(mlp_f32(x))
    assert out.shape == (batch, hidden_sizes[-1])
    assert jnp.allclose(out, ref, atol=1e-4, rtol=1e-4)

    # Layer-streaming path (same params, f32).
    out_stream = jax.block_until_ready(mlp_f32(x, force_streaming=True))
    assert out_stream.shape == (batch, hidden_sizes[-1])
    assert jnp.allclose(out_stream, ref, atol=1e-4, rtol=1e-4)

    # Default bf16 MXU path: bf16 weights resident, f32 accumulation.
    mlp_bf16 = MLPPallas(input_dim, hidden_sizes, kp, use_bf16_matmul=True)
    out_bf16 = jax.block_until_ready(mlp_bf16(x))
    assert out_bf16.shape == (batch, hidden_sizes[-1])
    assert jnp.allclose(out_bf16, ref, atol=5e-2, rtol=5e-2)

    print("KERNEL_OK")
</pallas_src>

<mosaic_0001>
module attributes {stable_mosaic.version = 11 : i64} {
  func.func @_resident_mlp_kernel(%arg0: i32, %arg1: memref<8x128xf32, #tpu.memory_space<vmem>>, %arg2: memref<128x128xf32, #tpu.memory_space<vmem>>, %arg3: memref<128x128xf32, #tpu.memory_space<vmem>>, %arg4: memref<128x128xf32, #tpu.memory_space<vmem>>, %arg5: memref<1x128xf32, #tpu.memory_space<vmem>>, %arg6: memref<1x128xf32, #tpu.memory_space<vmem>>, %arg7: memref<1x128xf32, #tpu.memory_space<vmem>>, %arg8: memref<8x128xf32, #tpu.memory_space<vmem>>) attributes {dimension_semantics = [#tpu.dimension_semantics<parallel>], iteration_bounds = array<i64: 1>, scalar_prefetch = 0 : i64, scratch_operands = 0 : i64, tpu.core_type = #tpu.core_type<tc>, window_params = [{transform_indices = @transform_0, window_bounds = array<i64: 8, 128>}, {pipeline_mode = #tpu.pipeline_mode<synchronous>, transform_indices = @transform_1, window_bounds = array<i64: 128, 128>}, {pipeline_mode = #tpu.pipeline_mode<synchronous>, transform_indices = @transform_2, window_bounds = array<i64: 128, 128>}, {pipeline_mode = #tpu.pipeline_mode<synchronous>, transform_indices = @transform_3, window_bounds = array<i64: 128, 128>}, {pipeline_mode = #tpu.pipeline_mode<synchronous>, transform_indices = @transform_4, window_bounds = array<i64: 1, 128>}, {pipeline_mode = #tpu.pipeline_mode<synchronous>, transform_indices = @transform_5, window_bounds = array<i64: 1, 128>}, {pipeline_mode = #tpu.pipeline_mode<synchronous>, transform_indices = @transform_6, window_bounds = array<i64: 1, 128>}, {transform_indices = @transform_7, window_bounds = array<i64: 8, 128>}]} {
    %c0 = arith.constant 0 : index
    %c0_0 = arith.constant 0 : index
    %0 = vector.load %arg1[%c0, %c0_0] : memref<8x128xf32, #tpu.memory_space<vmem>>, vector<8x128xf32>
    %c0_1 = arith.constant 0 : index
    %c0_2 = arith.constant 0 : index
    %1 = vector.load %arg2[%c0_1, %c0_2] : memref<128x128xf32, #tpu.memory_space<vmem>>, vector<128x128xf32>
    %cst = arith.constant dense<0.000000e+00> : vector<8x128xf32>
    %2 = tpu.matmul %0, %1, %cst {dimension_numbers = #tpu.dot_dimension_numbers<[1], [0], [0], [1], [0, 0, 1, 1], [], []>} : vector<8x128xf32>, vector<128x128xf32>, vector<8x128xf32> -> vector<8x128xf32>
    %c0_3 = arith.constant 0 : index
    %c0_4 = arith.constant 0 : index
    %3 = vector.load %arg5[%c0_3, %c0_4] : memref<1x128xf32, #tpu.memory_space<vmem>>, vector<1x128xf32>
    %4 = vector.broadcast %3 : vector<1x128xf32> to vector<8x128xf32>
    %5 = arith.addf %2, %4 : vector<8x128xf32>
    %cst_5 = arith.constant 0.000000e+00 : f32
    %6 = vector.broadcast %cst_5 : f32 to vector<8x128xf32>
    %7 = arith.cmpf ogt, %5, %6 : vector<8x128xf32>
    %cst_6 = arith.constant 0.00999999977 : f32
    %8 = vector.broadcast %cst_6 : f32 to vector<8x128xf32>
    %9 = arith.mulf %8, %5 : vector<8x128xf32>
    %10 = arith.select %7, %5, %9 : vector<8x128xi1>, vector<8x128xf32>
    %c0_7 = arith.constant 0 : index
    %c0_8 = arith.constant 0 : index
    %11 = vector.load %arg3[%c0_7, %c0_8] : memref<128x128xf32, #tpu.memory_space<vmem>>, vector<128x128xf32>
    %cst_9 = arith.constant dense<0.000000e+00> : vector<8x128xf32>
    %12 = tpu.matmul %10, %11, %cst_9 {dimension_numbers = #tpu.dot_dimension_numbers<[1], [0], [0], [1], [0, 0, 1, 1], [], []>} : vector<8x128xf32>, vector<128x128xf32>, vector<8x128xf32> -> vector<8x128xf32>
    %c0_10 = arith.constant 0 : index
    %c0_11 = arith.constant 0 : index
    %13 = vector.load %arg6[%c0_10, %c0_11] : memref<1x128xf32, #tpu.memory_space<vmem>>, vector<1x128xf32>
    %14 = vector.broadcast %13 : vector<1x128xf32> to vector<8x128xf32>
    %15 = arith.addf %12, %14 : vector<8x128xf32>
    %cst_12 = arith.constant 0.000000e+00 : f32
    %16 = vector.broadcast %cst_12 : f32 to vector<8x128xf32>
    %17 = arith.cmpf ogt, %15, %16 : vector<8x128xf32>
    %cst_13 = arith.constant 0.00999999977 : f32
    %18 = vector.broadcast %cst_13 : f32 to vector<8x128xf32>
    %19 = arith.mulf %18, %15 : vector<8x128xf32>
    %20 = arith.select %17, %15, %19 : vector<8x128xi1>, vector<8x128xf32>
    %c0_14 = arith.constant 0 : index
    %c0_15 = arith.constant 0 : index
    %21 = vector.load %arg4[%c0_14, %c0_15] : memref<128x128xf32, #tpu.memory_space<vmem>>, vector<128x128xf32>
    %cst_16 = arith.constant dense<0.000000e+00> : vector<8x128xf32>
    %22 = tpu.matmul %20, %21, %cst_16 {dimension_numbers = #tpu.dot_dimension_numbers<[1], [0], [0], [1], [0, 0, 1, 1], [], []>} : vector<8x128xf32>, vector<128x128xf32>, vector<8x128xf32> -> vector<8x128xf32>
    %c0_17 = arith.constant 0 : index
    %c0_18 = arith.constant 0 : index
    %23 = vector.load %arg7[%c0_17, %c0_18] : memref<1x128xf32, #tpu.memory_space<vmem>>, vector<1x128xf32>
    %24 = vector.broadcast %23 : vector<1x128xf32> to vector<8x128xf32>
    %25 = arith.addf %22, %24 : vector<8x128xf32>
    %c0_19 = arith.constant 0 : index
    %c0_20 = arith.constant 0 : index
    %26 = vector.load %arg8[%c0_19, %c0_20] : memref<8x128xf32, #tpu.memory_space<vmem>>, vector<8x128xf32>
    tpu.vector_store %arg8[%c0_19, %c0_20], %25 {strides = array<i32>} : memref<8x128xf32, #tpu.memory_space<vmem>>, vector<8x128xf32>,
    return
  }
  func.func @transform_0(%arg0: i32) -> (i32, i32) {
    %c0_i32 = arith.constant 0 : i32
    %c0_i32_0 = arith.constant 0 : i32
    return %arg0, %c0_i32 : i32, i32
  }
  func.func @transform_1(%arg0: i32) -> (i32, i32) {
    %c0_i32 = arith.constant 0 : i32
    %c0_i32_0 = arith.constant 0 : i32
    %c0_i32_1 = arith.constant 0 : i32
    return %c0_i32, %c0_i32_0 : i32, i32
  }
  func.func @transform_2(%arg0: i32) -> (i32, i32) {
    %c0_i32 = arith.constant 0 : i32
    %c0_i32_0 = arith.constant 0 : i32
    %c0_i32_1 = arith.constant 0 : i32
    return %c0_i32, %c0_i32_0 : i32, i32
  }
  func.func @transform_3(%arg0: i32) -> (i32, i32) {
    %c0_i32 = arith.constant 0 : i32
    %c0_i32_0 = arith.constant 0 : i32
    %c0_i32_1 = arith.constant 0 : i32
    return %c0_i32, %c0_i32_0 : i32, i32
  }
  func.func @transform_4(%arg0: i32) -> (i32, i32) {
    %c0_i32 = arith.constant 0 : i32
    %c0_i32_0 = arith.constant 0 : i32
    %c0_i32_1 = arith.constant 0 : i32
    return %c0_i32, %c0_i32_0 : i32, i32
  }
  func.func @transform_5(%arg0: i32) -> (i32, i32) {
    %c0_i32 = arith.constant 0 : i32
    %c0_i32_0 = arith.constant 0 : i32
    %c0_i32_1 = arith.constant 0 : i32
    return %c0_i32, %c0_i32_0 : i32, i32
  }
  func.func @transform_6(%arg0: i32) -> (i32, i32) {
    %c0_i32 = arith.constant 0 : i32
    %c0_i32_0 = arith.constant 0 : i32
    %c0_i32_1 = arith.constant 0 : i32
    return %c0_i32, %c0_i32_0 : i32, i32
  }
  func.func @transform_7(%arg0: i32) -> (i32, i32) {
    %c0_i32 = arith.constant 0 : i32
    %c0_i32_0 = arith.constant 0 : i32
    return %arg0, %c0_i32 : i32, i32
  }
}

module attributes {stable_mosaic.version = 11 : i64} {
  func.func @_resident_mlp_kernel(%arg0: i32, %arg1: memref<8x128xf32, #tpu.memory_space<vmem>>, %arg2: memref<128x128xf32, #tpu.memory_space<vmem>>, %arg3: memref<128x128xf32, #tpu.memory_space<vmem>>, %arg4: memref<128x128xf32, #tpu.memory_space<vmem>>, %arg5: memref<1x128xf32, #tpu.memory_space<vmem>>, %arg6: memref<1x128xf32, #tpu.memory_space<vmem>>, %arg7: memref<1x128xf32, #tpu.memory_space<vmem>>, %arg8: memref<8x128xf32, #tpu.memory_space<vmem>>) attributes {dimension_semantics = [#tpu.dimension_semantics<parallel>], iteration_bounds = array<i64: 1>, scalar_prefetch = 0 : i64, scratch_operands = 0 : i64, tpu.core_type = #tpu.core_type<tc>, window_params = [{transform_indices = @transform_0, window_bounds = array<i64: 8, 128>}, {pipeline_mode = #tpu.pipeline_mode<synchronous>, transform_indices = @transform_1, window_bounds = array<i64: 128, 128>}, {pipeline_mode = #tpu.pipeline_mode<synchronous>, transform_indices = @transform_2, window_bounds = array<i64: 128, 128>}, {pipeline_mode = #tpu.pipeline_mode<synchronous>, transform_indices = @transform_3, window_bounds = array<i64: 128, 128>}, {pipeline_mode = #tpu.pipeline_mode<synchronous>, transform_indices = @transform_4, window_bounds = array<i64: 1, 128>}, {pipeline_mode = #tpu.pipeline_mode<synchronous>, transform_indices = @transform_5, window_bounds = array<i64: 1, 128>}, {pipeline_mode = #tpu.pipeline_mode<synchronous>, transform_indices = @transform_6, window_bounds = array<i64: 1, 128>}, {transform_indices = @transform_7, window_bounds = array<i64: 8, 128>}]} {
    %c0 = arith.constant 0 : index
    %c0_0 = arith.constant 0 : index
    %0 = vector.load %arg1[%c0, %c0_0] : memref<8x128xf32, #tpu.memory_space<vmem>>, vector<8x128xf32>
    %c0_1 = arith.constant 0 : index
    %c0_2 = arith.constant 0 : index
    %1 = vector.load %arg2[%c0_1, %c0_2] : memref<128x128xf32, #tpu.memory_space<vmem>>, vector<128x128xf32>
    %cst = arith.constant dense<0.000000e+00> : vector<8x128xf32>
    %2 = tpu.matmul %0, %1, %cst {dimension_numbers = #tpu.dot_dimension_numbers<[1], [0], [0], [1], [0, 0, 1, 1], [], []>} : vector<8x128xf32>, vector<128x128xf32>, vector<8x128xf32> -> vector<8x128xf32>
    %c0_3 = arith.constant 0 : index
    %c0_4 = arith.constant 0 : index
    %3 = vector.load %arg5[%c0_3, %c0_4] : memref<1x128xf32, #tpu.memory_space<vmem>>, vector<1x128xf32>
    %4 = vector.broadcast %3 : vector<1x128xf32> to vector<8x128xf32>
    %5 = arith.addf %2, %4 : vector<8x128xf32>
    %cst_5 = arith.constant 0.000000e+00 : f32
    %6 = vector.broadcast %cst_5 : f32 to vector<8x128xf32>
    %7 = arith.cmpf ogt, %5, %6 : vector<8x128xf32>
    %cst_6 = arith.constant 0.00999999977 : f32
    %8 = vector.broadcast %cst_6 : f32 to vector<8x128xf32>
    %9 = arith.mulf %8, %5 : vector<8x128xf32>
    %10 = arith.select %7, %5, %9 : vector<8x128xi1>, vector<8x128xf32>
    %c0_7 = arith.constant 0 : index
    %c0_8 = arith.constant 0 : index
    %11 = vector.load %arg3[%c0_7, %c0_8] : memref<128x128xf32, #tpu.memory_space<vmem>>, vector<128x128xf32>
    %cst_9 = arith.constant dense<0.000000e+00> : vector<8x128xf32>
    %12 = tpu.matmul %10, %11, %cst_9 {dimension_numbers = #tpu.dot_dimension_numbers<[1], [0], [0], [1], [0, 0, 1, 1], [], []>} : vector<8x128xf32>, vector<128x128xf32>, vector<8x128xf32> -> vector<8x128xf32>
    %c0_10 = arith.constant 0 : index
    %c0_11 = arith.constant 0 : index
    %13 = vector.load %arg6[%c0_10, %c0_11] : memref<1x128xf32, #tpu.memory_space<vmem>>, vector<1x128xf32>
    %14 = vector.broadcast %13 : vector<1x128xf32> to vector<8x128xf32>
    %15 = arith.addf %12, %14 : vector<8x128xf32>
    %cst_12 = arith.constant 0.000000e+00 : f32
    %16 = vector.broadcast %cst_12 : f32 to vector<8x128xf32>
    %17 = arith.cmpf ogt, %15, %16 : vector<8x128xf32>
    %cst_13 = arith.constant 0.00999999977 : f32
    %18 = vector.broadcast %cst_13 : f32 to vector<8x128xf32>
    %19 = arith.mulf %18, %15 : vector<8x128xf32>
    %20 = arith.select %17, %15, %19 : vector<8x128xi1>, vector<8x128xf32>
    %c0_14 = arith.constant 0 : index
    %c0_15 = arith.constant 0 : index
    %21 = vector.load %arg4[%c0_14, %c0_15] : memref<128x128xf32, #tpu.memory_space<vmem>>, vector<128x128xf32>
    %cst_16 = arith.constant dense<0.000000e+00> : vector<8x128xf32>
    %22 = tpu.matmul %20, %21, %cst_16 {dimension_numbers = #tpu.dot_dimension_numbers<[1], [0], [0], [1], [0, 0, 1, 1], [], []>} : vector<8x128xf32>, vector<128x128xf32>, vector<8x128xf32> -> vector<8x128xf32>
    %c0_17 = arith.constant 0 : index
    %c0_18 = arith.constant 0 : index
    %23 = vector.load %arg7[%c0_17, %c0_18] : memref<1x128xf32, #tpu.memory_space<vmem>>, vector<1x128xf32>
    %24 = vector.broadcast %23 : vector<1x128xf32> to vector<8x128xf32>
    %25 = arith.addf %22, %24 : vector<8x128xf32>
    %c0_19 = arith.constant 0 : index
    %c0_20 = arith.constant 0 : index
    %26 = vector.load %arg8[%c0_19, %c0_20] : memref<8x128xf32, #tpu.memory_space<vmem>>, vector<8x128xf32>
    tpu.vector_store %arg8[%c0_19, %c0_20], %25 {strides = array<i32>} : memref<8x128xf32, #tpu.memory_space<vmem>>, vector<8x128xf32>,
    return
  }
  func.func @transform_0(%arg0: i32) -> (i32, i32) {
    %c0_i32 = arith.constant 0 : i32
    %c0_i32_0 = arith.constant 0 : i32
    return %arg0, %c0_i32 : i32, i32
  }
  func.func @transform_1(%arg0: i32) -> (i32, i32) {
    %c0_i32 = arith.constant 0 : i32
    %c0_i32_0 = arith.constant 0 : i32
    %c0_i32_1 = arith.constant 0 : i32
    return %c0_i32, %c0_i32_0 : i32, i32
  }
  func.func @transform_2(%arg0: i32) -> (i32, i32) {
    %c0_i32 = arith.constant 0 : i32
    %c0_i32_0 = arith.constant 0 : i32
    %c0_i32_1 = arith.constant 0 : i32
    return %c0_i32, %c0_i32_0 : i32, i32
  }
  func.func @transform_3(%arg0: i32) -> (i32, i32) {
    %c0_i32 = arith.constant 0 : i32
    %c0_i32_0 = arith.constant 0 : i32
    %c0_i32_1 = arith.constant 0 : i32
    return %c0_i32, %c0_i32_0 : i32, i32
  }
  func.func @transform_4(%arg0: i32) -> (i32, i32) {
    %c0_i32 = arith.constant 0 : i32
    %c0_i32_0 = arith.constant 0 : i32
    %c0_i32_1 = arith.constant 0 : i32
    return %c0_i32, %c0_i32_0 : i32, i32
  }
  func.func @transform_5(%arg0: i32) -> (i32, i32) {
    %c0_i32 = arith.constant 0 : i32
    %c0_i32_0 = arith.constant 0 : i32
    %c0_i32_1 = arith.constant 0 : i32
    return %c0_i32, %c0_i32_0 : i32, i32
  }
  func.func @transform_6(%arg0: i32) -> (i32, i32) {
    %c0_i32 = arith.constant 0 : i32
    %c0_i32_0 = arith.constant 0 : i32
    %c0_i32_1 = arith.constant 0 : i32
    return %c0_i32, %c0_i32_0 : i32, i32
  }
  func.func @transform_7(%arg0: i32) -> (i32, i32) {
    %c0_i32 = arith.constant 0 : i32
    %c0_i32_0 = arith.constant 0 : i32
    return %arg0, %c0_i32 : i32, i32
  }
}

</mosaic_0001>

<llo_original>
// kernel: tpu_custom_call.1
$region0: #{tpu_custom_call.1}
  #allocation0 [shape = 'u32[]', space=smem, size = 0x4, offset = 0x4, fixed_abs, tag = 'smem constant byte address 0x4 - core index']
  #allocation1 [shape = 'u32[144,128]{1,0:T(1,128)}', space=vmem, size = 0x12000, scoped, tag = 'internal scratch']
  %s0 = inlined_call_operand.hbm [shape: f32[8,128], index: 0, kind: input, shape index: {}]
  %s1 = inlined_call_operand.hbm [shape: f32[128,128], index: 1, kind: input, shape index: {}]
  %s2 = inlined_call_operand.hbm [shape: f32[128,128], index: 2, kind: input, shape index: {}]
  %s3 = inlined_call_operand.hbm [shape: f32[128,128], index: 3, kind: input, shape index: {}]
  %s4 = inlined_call_operand.vmem [shape: f32[1,128], index: 4, kind: input, shape index: {}]
  %s5 = inlined_call_operand.vmem [shape: f32[1,128], index: 5, kind: input, shape index: {}]
  %s6 = inlined_call_operand.vmem [shape: f32[1,128], index: 6, kind: input, shape index: {}]
  %s7 = inlined_call_operand.hbm [shape: f32[8,128], index: 7, kind: output, shape index: {}]
  %s8 = sld [smem:[#allocation0]]
  $region54: #{tpu_custom_call.1} parent=0
    _
  %s10 = ssub.s32 1, %s8
  %s11 = scalar_select 0, %s10, %s8
  $region1: #{tpu_custom_call.1} parent=0
    #allocation2 [shape = 'u8[4096]{0}', space=vmem, size = 0x1000, scoped, tag = 'input window, operand 0, single buffered']
    #allocation3 [shape = 's32[1]{0}', space=sflag, size = 0x4, scoped, tag = 'scoped memory for tpu_custom_call.1']
    #allocation4 [shape = 's32[1]{0}', space=sflag, size = 0x4, scoped, tag = 'scoped memory for tpu_custom_call.1']
    #allocation5 [shape = 'u8[65536]{0}', space=vmem, size = 0x10000, scoped, tag = 'input window, operand 1, single buffered']
    #allocation6 [shape = 's32[1]{0}', space=sflag, size = 0x4, scoped, tag = 'scoped memory for tpu_custom_call.1']
    #allocation7 [shape = 'u8[65536]{0}', space=vmem, size = 0x10000, scoped, tag = 'input window, operand 2, single buffered']
    #allocation8 [shape = 'u8[65536]{0}', space=vmem, size = 0x10000, scoped, tag = 'input window, operand 3, single buffered']
    #allocation9 [shape = 's32[1]{0}', space=sflag, size = 0x4, scoped, tag = 'scoped memory for tpu_custom_call.1']
    #allocation10 [shape = 'u8[4096]{0}', space=vmem, size = 0x1000, scoped, tag = 'output window, operand 0, single buffered']
    %12 = vsyncpa [#allocation3], 0
    %13 = vsyncpa [#allocation6], 0
    %14 = vsyncpa [#allocation9], 0
    %15 = vsyncpa [#allocation4], 0
    // Predicated region
    $region2: #{tpu_custom_call.1} parent=1 // pred_check
      _
    $region3: #{tpu_custom_call.1} parent=1 // pred_check_branch
      %17 = sbr.rel (0) target = $region5
    $region4: #{tpu_custom_call.1} parent=1 // pred_region
      %s19 = ssub.s32 128, 128
      %20 = vsyncadd [#allocation3], %s19
      %s22 = sshll.u32 [#allocation2], 4
      %s23 = int_to_ptr.vmem [resolvable:$true] %s22
      %25 = dma.hbm_to_vmem [thread:$0]  %s0, 128, %s23, [#allocation3]
    $region5: #{tpu_custom_call.1} parent=1 // pred_fallthru
      _
    // Predicated region
    $region6: #{tpu_custom_call.1} parent=1 // pred_check
      _
    $region7: #{tpu_custom_call.1} parent=1 // pred_check_branch
      %27 = sbr.rel (0) target = $region9
    $region8: #{tpu_custom_call.1} parent=1 // pred_region
      %s29 = ssub.s32 2048, 2048
      %30 = vsyncadd [#allocation6], %s29
      %s31 = sshll.u32 [#allocation5], 4
      %s32 = int_to_ptr.vmem [resolvable:$true] %s31
      %37 = dma.hbm_to_vmem [thread:$0]  %s1, 2048, %s32, [#allocation6], 128, 128, 8
    $region9: #{tpu_custom_call.1} parent=1 // pred_fallthru
      _
    // Predicated region
    $region10: #{tpu_custom_call.1} parent=1 // pred_check
      _
    $region11: #{tpu_custom_call.1} parent=1 // pred_check_branch
      %39 = sbr.rel (0) target = $region13
    $region12: #{tpu_custom_call.1} parent=1 // pred_region
      %s41 = ssub.s32 2048, 2048
      %42 = vsyncadd [#allocation6], %s41
      %s43 = sshll.u32 [#allocation7], 4
      %s44 = int_to_ptr.vmem [resolvable:$true] %s43
      %49 = dma.hbm_to_vmem [thread:$0]  %s2, 2048, %s44, [#allocation6], 128, 128, 8
    $region13: #{tpu_custom_call.1} parent=1 // pred_fallthru
      _
    // Predicated region
    $region14: #{tpu_custom_call.1} parent=1 // pred_check
      _
    $region15: #{tpu_custom_call.1} parent=1 // pred_check_branch
      %51 = sbr.rel (0) target = $region17
    $region16: #{tpu_custom_call.1} parent=1 // pred_region
      %s53 = ssub.s32 2048, 2048
      %54 = vsyncadd [#allocation9], %s53
      %s55 = sshll.u32 [#allocation8], 4
      %s56 = int_to_ptr.vmem [resolvable:$true] %s55
      %61 = dma.hbm_to_vmem [thread:$0]  %s3, 2048, %s56, [#allocation9], 128, 128, 8
    $region17: #{tpu_custom_call.1} parent=1 // pred_fallthru
      _
    // Predicated region
    $region18: #{tpu_custom_call.1} parent=1 // pred_check
      _
    $region19: #{tpu_custom_call.1} parent=1 // pred_check_branch
      %63 = sbr.rel (0) target = $region21
    $region20: #{tpu_custom_call.1} parent=1 // pred_region
      _
    $region21: #{tpu_custom_call.1} parent=1 // pred_fallthru
      _
    // Predicated region
    $region22: #{tpu_custom_call.1} parent=1 // pred_check
      _
    $region23: #{tpu_custom_call.1} parent=1 // pred_check_branch
      %65 = sbr.rel (0) target = $region25
    $region24: #{tpu_custom_call.1} parent=1 // pred_region
      _
    $region25: #{tpu_custom_call.1} parent=1 // pred_fallthru
      _
    // Predicated region
    $region26: #{tpu_custom_call.1} parent=1 // pred_check
      _
    $region27: #{tpu_custom_call.1} parent=1 // pred_check_branch
      %67 = sbr.rel (0) target = $region29
    $region28: #{tpu_custom_call.1} parent=1 // pred_region
      _
    $region29: #{tpu_custom_call.1} parent=1 // pred_fallthru
      _
    // Predicated region
    $region30: #{tpu_custom_call.1} parent=1 // pred_check
      _
    $region31: #{tpu_custom_call.1} parent=1 // pred_check_branch
      %69 = sbr.rel (0) target = $region33
    $region32: #{tpu_custom_call.1} parent=1 // pred_region
      %70 = dma.done [#allocation3], 128
    $region33: #{tpu_custom_call.1} parent=1 // pred_fallthru
      _
    // Predicated region
    $region34: #{tpu_custom_call.1} parent=1 // pred_check
      _
    $region35: #{tpu_custom_call.1} parent=1 // pred_check_branch
      %72 = sbr.rel (0) target = $region37
    $region36: #{tpu_custom_call.1} parent=1 // pred_region
      %73 = dma.done [#allocation6], 2048
    $region37: #{tpu_custom_call.1} parent=1 // pred_fallthru
      _
    // Predicated region
    $region38: #{tpu_custom_call.1} parent=1 // pred_check
      _
    $region39: #{tpu_custom_call.1} parent=1 // pred_check_branch
      %75 = sbr.rel (0) target = $region41
    $region40: #{tpu_custom_call.1} parent=1 // pred_region
      %76 = dma.done [#allocation6], 2048
    $region41: #{tpu_custom_call.1} parent=1 // pred_fallthru
      _
    // Predicated region
    $region42: #{tpu_custom_call.1} parent=1 // pred_check
      _
    $region43: #{tpu_custom_call.1} parent=1 // pred_check_branch
      %78 = sbr.rel (0) target = $region45
    $region44: #{tpu_custom_call.1} parent=1 // pred_region
      %79 = dma.done [#allocation9], 2048
    $region45: #{tpu_custom_call.1} parent=1 // pred_fallthru
      _
    %v80 = vld [vmem:[#allocation2] sm:$0xff]
    %v81 = vld [vmem:[#allocation5] sm:$0xff]
    %v82 = vld [vmem:[#allocation5 + $0x8] sm:$0xff]
    %v83 = vld [vmem:[#allocation5 + $0x10] sm:$0xff]
    %v84 = vld [vmem:[#allocation5 + $0x18] sm:$0xff]
    %v85 = vld [vmem:[#allocation5 + $0x20] sm:$0xff]
    %v86 = vld [vmem:[#allocation5 + $0x28] sm:$0xff]
    %v87 = vld [vmem:[#allocation5 + $0x30] sm:$0xff]
    %v88 = vld [vmem:[#allocation5 + $0x38] sm:$0xff]
    %v89 = vld [vmem:[#allocation5 + $0x40] sm:$0xff]
    %v90 = vld [vmem:[#allocation5 + $0x48] sm:$0xff]
    %v91 = vld [vmem:[#allocation5 + $0x50] sm:$0xff]
    %v92 = vld [vmem:[#allocation5 + $0x58] sm:$0xff]
    %v93 = vld [vmem:[#allocation5 + $0x60] sm:$0xff]
    %v94 = vld [vmem:[#allocation5 + $0x68] sm:$0xff]
    %v95 = vld [vmem:[#allocation5 + $0x70] sm:$0xff]
    %v96 = vld [vmem:[#allocation5 + $0x78] sm:$0xff]
    %v97 = vld [vmem:[%s4] sm:$0x1]
    %v99 = vlaneseq
    %v100 = vshrl.u32 %v99, 7
    %v101 = vsub.s32 0, %v100
    %v102 = vrot.slane %v97, %v101
    %104 = vmatprep.subr.mxu0 0.0
    %105 = vmatpush1.msra.mxu0 %v81
    %106 = vmatprep.subr.mxu0 0.0
    %107 = vmatpush1.msra.mxu0 %v82
    %108 = vmatprep.subr.mxu0 0.0
    %109 = vmatpush1.msra.mxu0 %v83
    %110 = vmatprep.subr.mxu0 0.0
    %111 = vmatpush1.msra.mxu0 %v84
    %112 = vmatprep.subr.mxu0 0.0
    %113 = vmatpush1.msra.mxu0 %v85
    %114 = vmatprep.subr.mxu0 0.0
    %115 = vmatpush1.msra.mxu0 %v86
    %116 = vmatprep.subr.mxu0 0.0
    %117 = vmatpush1.msra.mxu0 %v87
    %118 = vmatprep.subr.mxu0 0.0
    %119 = vmatpush1.msra.mxu0 %v88
    %120 = vmatprep.subr.mxu0 0.0
    %121 = vmatpush1.msra.mxu0 %v89
    %122 = vmatprep.subr.mxu0 0.0
    %123 = vmatpush1.msra.mxu0 %v90
    %124 = vmatprep.subr.mxu0 0.0
    %125 = vmatpush1.msra.mxu0 %v91
    %126 = vmatprep.subr.mxu0 0.0
    %127 = vmatpush1.msra.mxu0 %v92
    %128 = vmatprep.subr.mxu0 0.0
    %129 = vmatpush1.msra.mxu0 %v93
    %130 = vmatprep.subr.mxu0 0.0
    %131 = vmatpush1.msra.mxu0 %v94
    %132 = vmatprep.subr.mxu0 0.0
    %133 = vmatpush1.msra.mxu0 %v95
    %134 = vmatprep.subr.mxu0 0.0
    %135 = vmatpush1.msra.mxu0 %v96
    %136 = vmatprep.subr.mxu0 0.0
    %137 = vmatpush1.msra.mxu0 0.0
    %138 = vmatprep.subr.mxu0 0.0
    %139 = vmatpush1.msra.mxu0 0.0
    %140 = vmatprep.subr.mxu0 0.0
    %141 = vmatpush1.msra.mxu0 0.0
    %142 = vmatprep.subr.mxu0 0.0
    %143 = vmatpush1.msra.mxu0 0.0
    %144 = vmatprep.subr.mxu0 0.0
    %145 = vmatpush1.msra.mxu0 0.0
    %146 = vmatprep.subr.mxu0 0.0
    %147 = vmatpush1.msra.mxu0 0.0
    %148 = vmatprep.subr.mxu0 0.0
    %149 = vmatpush1.msra.mxu0 0.0
    %150 = vmatprep.subr.mxu0 0.0
    %151 = vmatpush1.msra.mxu0 0.0
    %152 = vmatprep.subr.mxu0 0.0
    %153 = vmatpush1.msra.mxu0 0.0
    %154 = vmatprep.subr.mxu0 0.0
    %155 = vmatpush1.msra.mxu0 0.0
    %156 = vmatprep.subr.mxu0 0.0
    %157 = vmatpush1.msra.mxu0 0.0
    %158 = vmatprep.subr.mxu0 0.0
    %159 = vmatpush1.msra.mxu0 0.0
    %160 = vmatprep.subr.mxu0 0.0
    %161 = vmatpush1.msra.mxu0 0.0
    %162 = vmatprep.subr.mxu0 0.0
    %163 = vmatpush1.msra.mxu0 0.0
    %164 = vmatprep.subr.mxu0 0.0
    %165 = vmatpush1.msra.mxu0 0.0
    %166 = vmatprep.subr.mxu0 0.0
    %167 = vmatpush1.msra.mxu0 0.0
    %168 = vmatprep.mubr.f32.mxu0 0.0
    %169 = vmatmul.mubr.f32.gmra.mrb[0].mxu0 %v80
    %v170 = vpop.f32.mrb[0].mxu0
    %v171 = vadd.f32 %v102, %v170
    %v172 = vpop.f32.mrb[0].mxu0
    %173 = vdwg.mxu0
    %vm174 = vcmp.gt.f32.partialorder %v171, 0.0
    %v175 = vmul.f32 %v171, 0.01
    %v176 = vsel %vm174, %v171, %v175
    %v177 = vld [vmem:[#allocation7] sm:$0xff]
    %v178 = vld [vmem:[#allocation7 + $0x8] sm:$0xff]
    %v179 = vld [vmem:[#allocation7 + $0x10] sm:$0xff]
    %v180 = vld [vmem:[#allocation7 + $0x18] sm:$0xff]
    %v181 = vld [vmem:[#allocation7 + $0x20] sm:$0xff]
    %v182 = vld [vmem:[#allocation7 + $0x28] sm:$0xff]
    %v183 = vld [vmem:[#allocation7 + $0x30] sm:$0xff]
    %v184 = vld [vmem:[#allocation7 + $0x38] sm:$0xff]
    %v185 = vld [vmem:[#allocation7 + $0x40] sm:$0xff]
    %v186 = vld [vmem:[#allocation7 + $0x48] sm:$0xff]
    %v187 = vld [vmem:[#allocation7 + $0x50] sm:$0xff]
    %v188 = vld [vmem:[#allocation7 + $0x58] sm:$0xff]
    %v189 = vld [vmem:[#allocation7 + $0x60] sm:$0xff]
    %v190 = vld [vmem:[#allocation7 + $0x68] sm:$0xff]
    %v191 = vld [vmem:[#allocation7 + $0x70] sm:$0xff]
    %v192 = vld [vmem:[#allocation7 + $0x78] sm:$0xff]
    %v193 = vld [vmem:[%s5] sm:$0x1]
    %v195 = vlaneseq
    %v196 = vshrl.u32 %v195, 7
    %v197 = vsub.s32 0, %v196
    %v198 = vrot.slane %v193, %v197
    %200 = vmatprep.subr.mxu0 0.0
    %201 = vmatpush1.msra.mxu0 %v177
    %202 = vmatprep.subr.mxu0 0.0
    %203 = vmatpush1.msra.mxu0 %v178
    %204 = vmatprep.subr.mxu0 0.0
    %205 = vmatpush1.msra.mxu0 %v179
    %206 = vmatprep.subr.mxu0 0.0
    %207 = vmatpush1.msra.mxu0 %v180
    %208 = vmatprep.subr.mxu0 0.0
    %209 = vmatpush1.msra.mxu0 %v181
    %210 = vmatprep.subr.mxu0 0.0
    %211 = vmatpush1.msra.mxu0 %v182
    %212 = vmatprep.subr.mxu0 0.0
    %213 = vmatpush1.msra.mxu0 %v183
    %214 = vmatprep.subr.mxu0 0.0
    %215 = vmatpush1.msra.mxu0 %v184
    %216 = vmatprep.subr.mxu0 0.0
    %217 = vmatpush1.msra.mxu0 %v185
    %218 = vmatprep.subr.mxu0 0.0
    %219 = vmatpush1.msra.mxu0 %v186
    %220 = vmatprep.subr.mxu0 0.0
    %221 = vmatpush1.msra.mxu0 %v187
    %222 = vmatprep.subr.mxu0 0.0
    %223 = vmatpush1.msra.mxu0 %v188
    %224 = vmatprep.subr.mxu0 0.0
    %225 = vmatpush1.msra.mxu0 %v189
    %226 = vmatprep.subr.mxu0 0.0
    %227 = vmatpush1.msra.mxu0 %v190
    %228 = vmatprep.subr.mxu0 0.0
    %229 = vmatpush1.msra.mxu0 %v191
    %230 = vmatprep.subr.mxu0 0.0
    %231 = vmatpush1.msra.mxu0 %v192
    %232 = vmatprep.subr.mxu0 0.0
    %233 = vmatpush1.msra.mxu0 0.0
    %234 = vmatprep.subr.mxu0 0.0
    %235 = vmatpush1.msra.mxu0 0.0
    %236 = vmatprep.subr.mxu0 0.0
    %237 = vmatpush1.msra.mxu0 0.0
    %238 = vmatprep.subr.mxu0 0.0
    %239 = vmatpush1.msra.mxu0 0.0
    %240 = vmatprep.subr.mxu0 0.0
    %241 = vmatpush1.msra.mxu0 0.0
    %242 = vmatprep.subr.mxu0 0.0
    %243 = vmatpush1.msra.mxu0 0.0
    %244 = vmatprep.subr.mxu0 0.0
    %245 = vmatpush1.msra.mxu0 0.0
    %246 = vmatprep.subr.mxu0 0.0
    %247 = vmatpush1.msra.mxu0 0.0
    %248 = vmatprep.subr.mxu0 0.0
    %249 = vmatpush1.msra.mxu0 0.0
    %250 = vmatprep.subr.mxu0 0.0
    %251 = vmatpush1.msra.mxu0 0.0
    %252 = vmatprep.subr.mxu0 0.0
    %253 = vmatpush1.msra.mxu0 0.0
    %254 = vmatprep.subr.mxu0 0.0
    %255 = vmatpush1.msra.mxu0 0.0
    %256 = vmatprep.subr.mxu0 0.0
    %257 = vmatpush1.msra.mxu0 0.0
    %258 = vmatprep.subr.mxu0 0.0
    %259 = vmatpush1.msra.mxu0 0.0
    %260 = vmatprep.subr.mxu0 0.0
    %261 = vmatpush1.msra.mxu0 0.0
    %262 = vmatprep.subr.mxu0 0.0
    %263 = vmatpush1.msra.mxu0 0.0
    %264 = vmatprep.mubr.f32.mxu0 0.0
    %265 = vmatmul.mubr.f32.gmra.mrb[0].mxu0 %v176
    %v266 = vpop.f32.mrb[0].mxu0
    %v267 = vadd.f32 %v198, %v266
    %v268 = vpop.f32.mrb[0].mxu0
    %269 = vdwg.mxu0
    %vm270 = vcmp.gt.f32.partialorder %v267, 0.0
    %v271 = vmul.f32 %v267, 0.01
    %v272 = vsel %vm270, %v267, %v271
    %v273 = vld [vmem:[#allocation8] sm:$0xff]
    %v274 = vld [vmem:[#allocation8 + $0x8] sm:$0xff]
    %v275 = vld [vmem:[#allocation8 + $0x10] sm:$0xff]
    %v276 = vld [vmem:[#allocation8 + $0x18] sm:$0xff]
    %v277 = vld [vmem:[#allocation8 + $0x20] sm:$0xff]
    %v278 = vld [vmem:[#allocation8 + $0x28] sm:$0xff]
    %v279 = vld [vmem:[#allocation8 + $0x30] sm:$0xff]
    %v280 = vld [vmem:[#allocation8 + $0x38] sm:$0xff]
    %v281 = vld [vmem:[#allocation8 + $0x40] sm:$0xff]
    %v282 = vld [vmem:[#allocation8 + $0x48] sm:$0xff]
    %v283 = vld [vmem:[#allocation8 + $0x50] sm:$0xff]
    %v284 = vld [vmem:[#allocation8 + $0x58] sm:$0xff]
    %v285 = vld [vmem:[#allocation8 + $0x60] sm:$0xff]
    %v286 = vld [vmem:[#allocation8 + $0x68] sm:$0xff]
    %v287 = vld [vmem:[#allocation8 + $0x70] sm:$0xff]
    %v288 = vld [vmem:[#allocation8 + $0x78] sm:$0xff]
    %v289 = vld [vmem:[%s6] sm:$0x1]
    %v291 = vlaneseq
    %v292 = vshrl.u32 %v291, 7
    %v293 = vsub.s32 0, %v292
    %v294 = vrot.slane %v289, %v293
    %296 = vmatprep.subr.mxu0 0.0
    %297 = vmatpush1.msra.mxu0 %v273
    %298 = vmatprep.subr.mxu0 0.0
    %299 = vmatpush1.msra.mxu0 %v274
    %300 = vmatprep.subr.mxu0 0.0
    %301 = vmatpush1.msra.mxu0 %v275
    %302 = vmatprep.subr.mxu0 0.0
    %303 = vmatpush1.msra.mxu0 %v276
    %304 = vmatprep.subr.mxu0 0.0
    %305 = vmatpush1.msra.mxu0 %v277
    %306 = vmatprep.subr.mxu0 0.0
    %307 = vmatpush1.msra.mxu0 %v278
    %308 = vmatprep.subr.mxu0 0.0
    %309 = vmatpush1.msra.mxu0 %v279
    %310 = vmatprep.subr.mxu0 0.0
    %311 = vmatpush1.msra.mxu0 %v280
    %312 = vmatprep.subr.mxu0 0.0
    %313 = vmatpush1.msra.mxu0 %v281
    %314 = vmatprep.subr.mxu0 0.0
    %315 = vmatpush1.msra.mxu0 %v282
    %316 = vmatprep.subr.mxu0 0.0
    %317 = vmatpush1.msra.mxu0 %v283
    %318 = vmatprep.subr.mxu0 0.0
    %319 = vmatpush1.msra.mxu0 %v284
    %320 = vmatprep.subr.mxu0 0.0
    %321 = vmatpush1.msra.mxu0 %v285
    %322 = vmatprep.subr.mxu0 0.0
    %323 = vmatpush1.msra.mxu0 %v286
    %324 = vmatprep.subr.mxu0 0.0
    %325 = vmatpush1.msra.mxu0 %v287
    %326 = vmatprep.subr.mxu0 0.0
    %327 = vmatpush1.msra.mxu0 %v288
    %328 = vmatprep.subr.mxu0 0.0
    %329 = vmatpush1.msra.mxu0 0.0
    %330 = vmatprep.subr.mxu0 0.0
    %331 = vmatpush1.msra.mxu0 0.0
    %332 = vmatprep.subr.mxu0 0.0
    %333 = vmatpush1.msra.mxu0 0.0
    %334 = vmatprep.subr.mxu0 0.0
    %335 = vmatpush1.msra.mxu0 0.0
    %336 = vmatprep.subr.mxu0 0.0
    %337 = vmatpush1.msra.mxu0 0.0
    %338 = vmatprep.subr.mxu0 0.0
    %339 = vmatpush1.msra.mxu0 0.0
    %340 = vmatprep.subr.mxu0 0.0
    %341 = vmatpush1.msra.mxu0 0.0
    %342 = vmatprep.subr.mxu0 0.0
    %343 = vmatpush1.msra.mxu0 0.0
    %344 = vmatprep.subr.mxu0 0.0
    %345 = vmatpush1.msra.mxu0 0.0
    %346 = vmatprep.subr.mxu0 0.0
    %347 = vmatpush1.msra.mxu0 0.0
    %348 = vmatprep.subr.mxu0 0.0
    %349 = vmatpush1.msra.mxu0 0.0
    %350 = vmatprep.subr.mxu0 0.0
    %351 = vmatpush1.msra.mxu0 0.0
    %352 = vmatprep.subr.mxu0 0.0
    %353 = vmatpush1.msra.mxu0 0.0
    %354 = vmatprep.subr.mxu0 0.0
    %355 = vmatpush1.msra.mxu0 0.0
    %356 = vmatprep.subr.mxu0 0.0
    %357 = vmatpush1.msra.mxu0 0.0
    %358 = vmatprep.subr.mxu0 0.0
    %359 = vmatpush1.msra.mxu0 0.0
    %360 = vmatprep.mubr.f32.mxu0 0.0
    %361 = vmatmul.mubr.f32.gmra.mrb[0].mxu0 %v272
    %v362 = vpop.f32.mrb[0].mxu0
    %v363 = vadd.f32 %v294, %v362
    %v364 = vpop.f32.mrb[0].mxu0
    %365 = vdwg.mxu0
    %366 = vst [vmem:[#allocation10] sm:$0xff] %v363
    // Predicated region
    $region46: #{tpu_custom_call.1} parent=1 // pred_check
      _
    $region47: #{tpu_custom_call.1} parent=1 // pred_check_branch
      %368 = sbr.rel (0) target = $region49
    $region48: #{tpu_custom_call.1} parent=1 // pred_region
      %s370 = ssub.s32 128, 128
      %371 = vsyncadd [#allocation4], %s370
      %s373 = sshll.u32 [#allocation10], 4
      %s374 = int_to_ptr.vmem [resolvable:$true] %s373
      %376 = dma.vmem_to_hbm [thread:$0]  %s374, 128, %s7, [#allocation4]
    $region49: #{tpu_custom_call.1} parent=1 // pred_fallthru
      _
    // Predicated region
    $region50: #{tpu_custom_call.1} parent=1 // pred_check
      _
    $region51: #{tpu_custom_call.1} parent=1 // pred_check_branch
      %378 = sbr.rel (0) target = $region53
    $region52: #{tpu_custom_call.1} parent=1 // pred_region
      %379 = dma.done [#allocation4], 128
    $region53: #{tpu_custom_call.1} parent=1 // pred_fallthru
      _
    %380 = vsyncpa [#allocation3], 1
    %381 = vsyncpa [#allocation6], 1
    %382 = vsyncpa [#allocation9], 1
    %383 = vsyncpa [#allocation4], 1

// kernel: tpu_custom_call.1
$region0: #{tpu_custom_call.1}
  #allocation0 [shape = 'u32[]', space=smem, size = 0x4, offset = 0x4, fixed_abs, tag = 'smem constant byte address 0x4 - core index']
  #allocation1 [shape = 'u32[144,128]{1,0:T(1,128)}', space=vmem, size = 0x12000, scoped, tag = 'internal scratch']
  %s0 = inlined_call_operand.hbm [shape: f32[8,128], index: 0, kind: input, shape index: {}]
  %s1 = inlined_call_operand.hbm [shape: f32[128,128], index: 1, kind: input, shape index: {}]
  %s2 = inlined_call_operand.hbm [shape: f32[128,128], index: 2, kind: input, shape index: {}]
  %s3 = inlined_call_operand.hbm [shape: f32[128,128], index: 3, kind: input, shape index: {}]
  %s4 = inlined_call_operand.vmem [shape: f32[1,128], index: 4, kind: input, shape index: {}]
  %s5 = inlined_call_operand.vmem [shape: f32[1,128], index: 5, kind: input, shape index: {}]
  %s6 = inlined_call_operand.vmem [shape: f32[1,128], index: 6, kind: input, shape index: {}]
  %s7 = inlined_call_operand.hbm [shape: f32[8,128], index: 7, kind: output, shape index: {}]
  %s8 = sld [smem:[#allocation0]]
  $region54: #{tpu_custom_call.1} parent=0
    _
  %s10 = ssub.s32 1, %s8
  %s11 = scalar_select 0, %s10, %s8
  $region1: #{tpu_custom_call.1} parent=0
    #allocation2 [shape = 'u8[4096]{0}', space=vmem, size = 0x1000, scoped, tag = 'input window, operand 0, single buffered']
    #allocation3 [shape = 's32[1]{0}', space=sflag, size = 0x4, scoped, tag = 'scoped memory for tpu_custom_call.1']
    #allocation4 [shape = 's32[1]{0}', space=sflag, size = 0x4, scoped, tag = 'scoped memory for tpu_custom_call.1']
    #allocation5 [shape = 'u8[65536]{0}', space=vmem, size = 0x10000, scoped, tag = 'input window, operand 1, single buffered']
    #allocation6 [shape = 's32[1]{0}', space=sflag, size = 0x4, scoped, tag = 'scoped memory for tpu_custom_call.1']
    #allocation7 [shape = 'u8[65536]{0}', space=vmem, size = 0x10000, scoped, tag = 'input window, operand 2, single buffered']
    #allocation8 [shape = 'u8[65536]{0}', space=vmem, size = 0x10000, scoped, tag = 'input window, operand 3, single buffered']
    #allocation9 [shape = 's32[1]{0}', space=sflag, size = 0x4, scoped, tag = 'scoped memory for tpu_custom_call.1']
    #allocation10 [shape = 'u8[4096]{0}', space=vmem, size = 0x1000, scoped, tag = 'output window, operand 0, single buffered']
    %12 = vsyncpa [#allocation3], 0
    %13 = vsyncpa [#allocation6], 0
    %14 = vsyncpa [#allocation9], 0
    %15 = vsyncpa [#allocation4], 0
    // Predicated region
    $region2: #{tpu_custom_call.1} parent=1 // pred_check
      _
    $region3: #{tpu_custom_call.1} parent=1 // pred_check_branch
      %17 = sbr.rel (0) target = $region5
    $region4: #{tpu_custom_call.1} parent=1 // pred_region
      %s19 = ssub.s32 128, 128
      %20 = vsyncadd [#allocation3], %s19
      %s22 = sshll.u32 [#allocation2], 4
      %s23 = int_to_ptr.vmem [resolvable:$true] %s22
      %25 = dma.hbm_to_vmem [thread:$0]  %s0, 128, %s23, [#allocation3]
    $region5: #{tpu_custom_call.1} parent=1 // pred_fallthru
      _
    // Predicated region
    $region6: #{tpu_custom_call.1} parent=1 // pred_check
      _
    $region7: #{tpu_custom_call.1} parent=1 // pred_check_branch
      %27 = sbr.rel (0) target = $region9
    $region8: #{tpu_custom_call.1} parent=1 // pred_region
      %s29 = ssub.s32 2048, 2048
      %30 = vsyncadd [#allocation6], %s29
      %s31 = sshll.u32 [#allocation5], 4
      %s32 = int_to_ptr.vmem [resolvable:$true] %s31
      %37 = dma.hbm_to_vmem [thread:$0]  %s1, 2048, %s32, [#allocation6], 128, 128, 8
    $region9: #{tpu_custom_call.1} parent=1 // pred_fallthru
      _
    // Predicated region
    $region10: #{tpu_custom_call.1} parent=1 // pred_check
      _
    $region11: #{tpu_custom_call.1} parent=1 // pred_check_branch
      %39 = sbr.rel (0) target = $region13
    $region12: #{tpu_custom_call.1} parent=1 // pred_region
      %s41 = ssub.s32 2048, 2048
      %42 = vsyncadd [#allocation6], %s41
      %s43 = sshll.u32 [#allocation7], 4
      %s44 = int_to_ptr.vmem [resolvable:$true] %s43
      %49 = dma.hbm_to_vmem [thread:$0]  %s2, 2048, %s44, [#allocation6], 128, 128, 8
    $region13: #{tpu_custom_call.1} parent=1 // pred_fallthru
      _
    // Predicated region
    $region14: #{tpu_custom_call.1} parent=1 // pred_check
      _
    $region15: #{tpu_custom_call.1} parent=1 // pred_check_branch
      %51 = sbr.rel (0) target = $region17
    $region16: #{tpu_custom_call.1} parent=1 // pred_region
      %s53 = ssub.s32 2048, 2048
      %54 = vsyncadd [#allocation9], %s53
      %s55 = sshll.u32 [#allocation8], 4
      %s56 = int_to_ptr.vmem [resolvable:$true] %s55
      %61 = dma.hbm_to_vmem [thread:$0]  %s3, 2048, %s56, [#allocation9], 128, 128, 8
    $region17: #{tpu_custom_call.1} parent=1 // pred_fallthru
      _
    // Predicated region
    $region18: #{tpu_custom_call.1} parent=1 // pred_check
      _
    $region19: #{tpu_custom_call.1} parent=1 // pred_check_branch
      %63 = sbr.rel (0) target = $region21
    $region20: #{tpu_custom_call.1} parent=1 // pred_region
      _
    $region21: #{tpu_custom_call.1} parent=1 // pred_fallthru
      _
    // Predicated region
    $region22: #{tpu_custom_call.1} parent=1 // pred_check
      _
    $region23: #{tpu_custom_call.1} parent=1 // pred_check_branch
      %65 = sbr.rel (0) target = $region25
    $region24: #{tpu_custom_call.1} parent=1 // pred_region
      _
    $region25: #{tpu_custom_call.1} parent=1 // pred_fallthru
      _
    // Predicated region
    $region26: #{tpu_custom_call.1} parent=1 // pred_check
      _
    $region27: #{tpu_custom_call.1} parent=1 // pred_check_branch
      %67 = sbr.rel (0) target = $region29
    $region28: #{tpu_custom_call.1} parent=1 // pred_region
      _
    $region29: #{tpu_custom_call.1} parent=1 // pred_fallthru
      _
    // Predicated region
    $region30: #{tpu_custom_call.1} parent=1 // pred_check
      _
    $region31: #{tpu_custom_call.1} parent=1 // pred_check_branch
      %69 = sbr.rel (0) target = $region33
    $region32: #{tpu_custom_call.1} parent=1 // pred_region
      %70 = dma.done [#allocation3], 128
    $region33: #{tpu_custom_call.1} parent=1 // pred_fallthru
      _
    // Predicated region
    $region34: #{tpu_custom_call.1} parent=1 // pred_check
      _
    $region35: #{tpu_custom_call.1} parent=1 // pred_check_branch
      %72 = sbr.rel (0) target = $region37
    $region36: #{tpu_custom_call.1} parent=1 // pred_region
      %73 = dma.done [#allocation6], 2048
    $region37: #{tpu_custom_call.1} parent=1 // pred_fallthru
      _
    // Predicated region
    $region38: #{tpu_custom_call.1} parent=1 // pred_check
      _
    $region39: #{tpu_custom_call.1} parent=1 // pred_check_branch
      %75 = sbr.rel (0) target = $region41
    $region40: #{tpu_custom_call.1} parent=1 // pred_region
      %76 = dma.done [#allocation6], 2048
    $region41: #{tpu_custom_call.1} parent=1 // pred_fallthru
      _
    // Predicated region
    $region42: #{tpu_custom_call.1} parent=1 // pred_check
      _
    $region43: #{tpu_custom_call.1} parent=1 // pred_check_branch
      %78 = sbr.rel (0) target = $region45
    $region44: #{tpu_custom_call.1} parent=1 // pred_region
      %79 = dma.done [#allocation9], 2048
    $region45: #{tpu_custom_call.1} parent=1 // pred_fallthru
      _
    %v80 = vld [vmem:[#allocation2] sm:$0xff]
    %v81 = vld [vmem:[#allocation5] sm:$0xff]
    %v82 = vld [vmem:[#allocation5 + $0x8] sm:$0xff]
    %v83 = vld [vmem:[#allocation5 + $0x10] sm:$0xff]
    %v84 = vld [vmem:[#allocation5 + $0x18] sm:$0xff]
    %v85 = vld [vmem:[#allocation5 + $0x20] sm:$0xff]
    %v86 = vld [vmem:[#allocation5 + $0x28] sm:$0xff]
    %v87 = vld [vmem:[#allocation5 + $0x30] sm:$0xff]
    %v88 = vld [vmem:[#allocation5 + $0x38] sm:$0xff]
    %v89 = vld [vmem:[#allocation5 + $0x40] sm:$0xff]
    %v90 = vld [vmem:[#allocation5 + $0x48] sm:$0xff]
    %v91 = vld [vmem:[#allocation5 + $0x50] sm:$0xff]
    %v92 = vld [vmem:[#allocation5 + $0x58] sm:$0xff]
    %v93 = vld [vmem:[#allocation5 + $0x60] sm:$0xff]
    %v94 = vld [vmem:[#allocation5 + $0x68] sm:$0xff]
    %v95 = vld [vmem:[#allocation5 + $0x70] sm:$0xff]
    %v96 = vld [vmem:[#allocation5 + $0x78] sm:$0xff]
    %v97 = vld [vmem:[%s4] sm:$0x1]
    %v99 = vlaneseq
    %v100 = vshrl.u32 %v99, 7
    %v101 = vsub.s32 0, %v100
    %v102 = vrot.slane %v97, %v101
    %104 = vmatprep.subr.mxu0 0.0
    %105 = vmatpush1.msra.mxu0 %v81
    %106 = vmatprep.subr.mxu0 0.0
    %107 = vmatpush1.msra.mxu0 %v82
    %108 = vmatprep.subr.mxu0 0.0
    %109 = vmatpush1.msra.mxu0 %v83
    %110 = vmatprep.subr.mxu0 0.0
    %111 = vmatpush1.msra.mxu0 %v84
    %112 = vmatprep.subr.mxu0 0.0
    %113 = vmatpush1.msra.mxu0 %v85
    %114 = vmatprep.subr.mxu0 0.0
    %115 = vmatpush1.msra.mxu0 %v86
    %116 = vmatprep.subr.mxu0 0.0
    %117 = vmatpush1.msra.mxu0 %v87
    %118 = vmatprep.subr.mxu0 0.0
    %119 = vmatpush1.msra.mxu0 %v88
    %120 = vmatprep.subr.mxu0 0.0
    %121 = vmatpush1.msra.mxu0 %v89
    %122 = vmatprep.subr.mxu0 0.0
    %123 = vmatpush1.msra.mxu0 %v90
    %124 = vmatprep.subr.mxu0 0.0
    %125 = vmatpush1.msra.mxu0 %v91
    %126 = vmatprep.subr.mxu0 0.0
    %127 = vmatpush1.msra.mxu0 %v92
    %128 = vmatprep.subr.mxu0 0.0
    %129 = vmatpush1.msra.mxu0 %v93
    %130 = vmatprep.subr.mxu0 0.0
    %131 = vmatpush1.msra.mxu0 %v94
    %132 = vmatprep.subr.mxu0 0.0
    %133 = vmatpush1.msra.mxu0 %v95
    %134 = vmatprep.subr.mxu0 0.0
    %135 = vmatpush1.msra.mxu0 %v96
    %136 = vmatprep.subr.mxu0 0.0
    %137 = vmatpush1.msra.mxu0 0.0
    %138 = vmatprep.subr.mxu0 0.0
    %139 = vmatpush1.msra.mxu0 0.0
    %140 = vmatprep.subr.mxu0 0.0
    %141 = vmatpush1.msra.mxu0 0.0
    %142 = vmatprep.subr.mxu0 0.0
    %143 = vmatpush1.msra.mxu0 0.0
    %144 = vmatprep.subr.mxu0 0.0
    %145 = vmatpush1.msra.mxu0 0.0
    %146 = vmatprep.subr.mxu0 0.0
    %147 = vmatpush1.msra.mxu0 0.0
    %148 = vmatprep.subr.mxu0 0.0
    %149 = vmatpush1.msra.mxu0 0.0
    %150 = vmatprep.subr.mxu0 0.0
    %151 = vmatpush1.msra.mxu0 0.0
    %152 = vmatprep.subr.mxu0 0.0
    %153 = vmatpush1.msra.mxu0 0.0
    %154 = vmatprep.subr.mxu0 0.0
    %155 = vmatpush1.msra.mxu0 0.0
    %156 = vmatprep.subr.mxu0 0.0
    %157 = vmatpush1.msra.mxu0 0.0
    %158 = vmatprep.subr.mxu0 0.0
    %159 = vmatpush1.msra.mxu0 0.0
    %160 = vmatprep.subr.mxu0 0.0
    %161 = vmatpush1.msra.mxu0 0.0
    %162 = vmatprep.subr.mxu0 0.0
    %163 = vmatpush1.msra.mxu0 0.0
    %164 = vmatprep.subr.mxu0 0.0
    %165 = vmatpush1.msra.mxu0 0.0
    %166 = vmatprep.subr.mxu0 0.0
    %167 = vmatpush1.msra.mxu0 0.0
    %168 = vmatprep.mubr.f32.mxu0 0.0
    %169 = vmatmul.mubr.f32.gmra.mrb[0].mxu0 %v80
    %v170 = vpop.f32.mrb[0].mxu0
    %v171 = vadd.f32 %v102, %v170
    %v172 = vpop.f32.mrb[0].mxu0
    %173 = vdwg.mxu0
    %vm174 = vcmp.gt.f32.partialorder %v171, 0.0
    %v175 = vmul.f32 %v171, 0.01
    %v176 = vsel %vm174, %v171, %v175
    %v177 = vld [vmem:[#allocation7] sm:$0xff]
    %v178 = vld [vmem:[#allocation7 + $0x8] sm:$0xff]
    %v179 = vld [vmem:[#allocation7 + $0x10] sm:$0xff]
    %v180 = vld [vmem:[#allocation7 + $0x18] sm:$0xff]
    %v181 = vld [vmem:[#allocation7 + $0x20] sm:$0xff]
    %v182 = vld [vmem:[#allocation7 + $0x28] sm:$0xff]
    %v183 = vld [vmem:[#allocation7 + $0x30] sm:$0xff]
    %v184 = vld [vmem:[#allocation7 + $0x38] sm:$0xff]
    %v185 = vld [vmem:[#allocation7 + $0x40] sm:$0xff]
    %v186 = vld [vmem:[#allocation7 + $0x48] sm:$0xff]
    %v187 = vld [vmem:[#allocation7 + $0x50] sm:$0xff]
    %v188 = vld [vmem:[#allocation7 + $0x58] sm:$0xff]
    %v189 = vld [vmem:[#allocation7 + $0x60] sm:$0xff]
    %v190 = vld [vmem:[#allocation7 + $0x68] sm:$0xff]
    %v191 = vld [vmem:[#allocation7 + $0x70] sm:$0xff]
    %v192 = vld [vmem:[#allocation7 + $0x78] sm:$0xff]
    %v193 = vld [vmem:[%s5] sm:$0x1]
    %v195 = vlaneseq
    %v196 = vshrl.u32 %v195, 7
    %v197 = vsub.s32 0, %v196
    %v198 = vrot.slane %v193, %v197
    %200 = vmatprep.subr.mxu0 0.0
    %201 = vmatpush1.msra.mxu0 %v177
    %202 = vmatprep.subr.mxu0 0.0
    %203 = vmatpush1.msra.mxu0 %v178
    %204 = vmatprep.subr.mxu0 0.0
    %205 = vmatpush1.msra.mxu0 %v179
    %206 = vmatprep.subr.mxu0 0.0
    %207 = vmatpush1.msra.mxu0 %v180
    %208 = vmatprep.subr.mxu0 0.0
    %209 = vmatpush1.msra.mxu0 %v181
    %210 = vmatprep.subr.mxu0 0.0
    %211 = vmatpush1.msra.mxu0 %v182
    %212 = vmatprep.subr.mxu0 0.0
    %213 = vmatpush1.msra.mxu0 %v183
    %214 = vmatprep.subr.mxu0 0.0
    %215 = vmatpush1.msra.mxu0 %v184
    %216 = vmatprep.subr.mxu0 0.0
    %217 = vmatpush1.msra.mxu0 %v185
    %218 = vmatprep.subr.mxu0 0.0
    %219 = vmatpush1.msra.mxu0 %v186
    %220 = vmatprep.subr.mxu0 0.0
    %221 = vmatpush1.msra.mxu0 %v187
    %222 = vmatprep.subr.mxu0 0.0
    %223 = vmatpush1.msra.mxu0 %v188
    %224 = vmatprep.subr.mxu0 0.0
    %225 = vmatpush1.msra.mxu0 %v189
    %226 = vmatprep.subr.mxu0 0.0
    %227 = vmatpush1.msra.mxu0 %v190
    %228 = vmatprep.subr.mxu0 0.0
    %229 = vmatpush1.msra.mxu0 %v191
    %230 = vmatprep.subr.mxu0 0.0
    %231 = vmatpush1.msra.mxu0 %v192
    %232 = vmatprep.subr.mxu0 0.0
    %233 = vmatpush1.msra.mxu0 0.0
    %234 = vmatprep.subr.mxu0 0.0
    %235 = vmatpush1.msra.mxu0 0.0
    %236 = vmatprep.subr.mxu0 0.0
    %237 = vmatpush1.msra.mxu0 0.0
    %238 = vmatprep.subr.mxu0 0.0
    %239 = vmatpush1.msra.mxu0 0.0
    %240 = vmatprep.subr.mxu0 0.0
    %241 = vmatpush1.msra.mxu0 0.0
    %242 = vmatprep.subr.mxu0 0.0
    %243 = vmatpush1.msra.mxu0 0.0
    %244 = vmatprep.subr.mxu0 0.0
    %245 = vmatpush1.msra.mxu0 0.0
    %246 = vmatprep.subr.mxu0 0.0
    %247 = vmatpush1.msra.mxu0 0.0
    %248 = vmatprep.subr.mxu0 0.0
    %249 = vmatpush1.msra.mxu0 0.0
    %250 = vmatprep.subr.mxu0 0.0
    %251 = vmatpush1.msra.mxu0 0.0
    %252 = vmatprep.subr.mxu0 0.0
    %253 = vmatpush1.msra.mxu0 0.0
    %254 = vmatprep.subr.mxu0 0.0
    %255 = vmatpush1.msra.mxu0 0.0
    %256 = vmatprep.subr.mxu0 0.0
    %257 = vmatpush1.msra.mxu0 0.0
    %258 = vmatprep.subr.mxu0 0.0
    %259 = vmatpush1.msra.mxu0 0.0
    %260 = vmatprep.subr.mxu0 0.0
    %261 = vmatpush1.msra.mxu0 0.0
    %262 = vmatprep.subr.mxu0 0.0
    %263 = vmatpush1.msra.mxu0 0.0
    %264 = vmatprep.mubr.f32.mxu0 0.0
    %265 = vmatmul.mubr.f32.gmra.mrb[0].mxu0 %v176
    %v266 = vpop.f32.mrb[0].mxu0
    %v267 = vadd.f32 %v198, %v266
    %v268 = vpop.f32.mrb[0].mxu0
    %269 = vdwg.mxu0
    %vm270 = vcmp.gt.f32.partialorder %v267, 0.0
    %v271 = vmul.f32 %v267, 0.01
    %v272 = vsel %vm270, %v267, %v271
    %v273 = vld [vmem:[#allocation8] sm:$0xff]
    %v274 = vld [vmem:[#allocation8 + $0x8] sm:$0xff]
    %v275 = vld [vmem:[#allocation8 + $0x10] sm:$0xff]
    %v276 = vld [vmem:[#allocation8 + $0x18] sm:$0xff]
    %v277 = vld [vmem:[#allocation8 + $0x20] sm:$0xff]
    %v278 = vld [vmem:[#allocation8 + $0x28] sm:$0xff]
    %v279 = vld [vmem:[#allocation8 + $0x30] sm:$0xff]
    %v280 = vld [vmem:[#allocation8 + $0x38] sm:$0xff]
    %v281 = vld [vmem:[#allocation8 + $0x40] sm:$0xff]
    %v282 = vld [vmem:[#allocation8 + $0x48] sm:$0xff]
    %v283 = vld [vmem:[#allocation8 + $0x50] sm:$0xff]
    %v284 = vld [vmem:[#allocation8 + $0x58] sm:$0xff]
    %v285 = vld [vmem:[#allocation8 + $0x60] sm:$0xff]
    %v286 = vld [vmem:[#allocation8 + $0x68] sm:$0xff]
    %v287 = vld [vmem:[#allocation8 + $0x70] sm:$0xff]
    %v288 = vld [vmem:[#allocation8 + $0x78] sm:$0xff]
    %v289 = vld [vmem:[%s6] sm:$0x1]
    %v291 = vlaneseq
    %v292 = vshrl.u32 %v291, 7
    %v293 = vsub.s32 0, %v292
    %v294 = vrot.slane %v289, %v293
    %296 = vmatprep.subr.mxu0 0.0
    %297 = vmatpush1.msra.mxu0 %v273
    %298 = vmatprep.subr.mxu0 0.0
    %299 = vmatpush1.msra.mxu0 %v274
    %300 = vmatprep.subr.mxu0 0.0
    %301 = vmatpush1.msra.mxu0 %v275
    %302 = vmatprep.subr.mxu0 0.0
    %303 = vmatpush1.msra.mxu0 %v276
    %304 = vmatprep.subr.mxu0 0.0
    %305 = vmatpush1.msra.mxu0 %v277
    %306 = vmatprep.subr.mxu0 0.0
    %307 = vmatpush1.msra.mxu0 %v278
    %308 = vmatprep.subr.mxu0 0.0
    %309 = vmatpush1.msra.mxu0 %v279
    %310 = vmatprep.subr.mxu0 0.0
    %311 = vmatpush1.msra.mxu0 %v280
    %312 = vmatprep.subr.mxu0 0.0
    %313 = vmatpush1.msra.mxu0 %v281
    %314 = vmatprep.subr.mxu0 0.0
    %315 = vmatpush1.msra.mxu0 %v282
    %316 = vmatprep.subr.mxu0 0.0
    %317 = vmatpush1.msra.mxu0 %v283
    %318 = vmatprep.subr.mxu0 0.0
    %319 = vmatpush1.msra.mxu0 %v284
    %320 = vmatprep.subr.mxu0 0.0
    %321 = vmatpush1.msra.mxu0 %v285
    %322 = vmatprep.subr.mxu0 0.0
    %323 = vmatpush1.msra.mxu0 %v286
    %324 = vmatprep.subr.mxu0 0.0
    %325 = vmatpush1.msra.mxu0 %v287
    %326 = vmatprep.subr.mxu0 0.0
    %327 = vmatpush1.msra.mxu0 %v288
    %328 = vmatprep.subr.mxu0 0.0
    %329 = vmatpush1.msra.mxu0 0.0
    %330 = vmatprep.subr.mxu0 0.0
    %331 = vmatpush1.msra.mxu0 0.0
    %332 = vmatprep.subr.mxu0 0.0
    %333 = vmatpush1.msra.mxu0 0.0
    %334 = vmatprep.subr.mxu0 0.0
    %335 = vmatpush1.msra.mxu0 0.0
    %336 = vmatprep.subr.mxu0 0.0
    %337 = vmatpush1.msra.mxu0 0.0
    %338 = vmatprep.subr.mxu0 0.0
    %339 = vmatpush1.msra.mxu0 0.0
    %340 = vmatprep.subr.mxu0 0.0
    %341 = vmatpush1.msra.mxu0 0.0
    %342 = vmatprep.subr.mxu0 0.0
    %343 = vmatpush1.msra.mxu0 0.0
    %344 = vmatprep.subr.mxu0 0.0
    %345 = vmatpush1.msra.mxu0 0.0
    %346 = vmatprep.subr.mxu0 0.0
    %347 = vmatpush1.msra.mxu0 0.0
    %348 = vmatprep.subr.mxu0 0.0
    %349 = vmatpush1.msra.mxu0 0.0
    %350 = vmatprep.subr.mxu0 0.0
    %351 = vmatpush1.msra.mxu0 0.0
    %352 = vmatprep.subr.mxu0 0.0
    %353 = vmatpush1.msra.mxu0 0.0
    %354 = vmatprep.subr.mxu0 0.0
    %355 = vmatpush1.msra.mxu0 0.0
    %356 = vmatprep.subr.mxu0 0.0
    %357 = vmatpush1.msra.mxu0 0.0
    %358 = vmatprep.subr.mxu0 0.0
    %359 = vmatpush1.msra.mxu0 0.0
    %360 = vmatprep.mubr.f32.mxu0 0.0
    %361 = vmatmul.mubr.f32.gmra.mrb[0].mxu0 %v272
    %v362 = vpop.f32.mrb[0].mxu0
    %v363 = vadd.f32 %v294, %v362
    %v364 = vpop.f32.mrb[0].mxu0
    %365 = vdwg.mxu0
    %366 = vst [vmem:[#allocation10] sm:$0xff] %v363
    // Predicated region
    $region46: #{tpu_custom_call.1} parent=1 // pred_check
      _
    $region47: #{tpu_custom_call.1} parent=1 // pred_check_branch
      %368 = sbr.rel (0) target = $region49
    $region48: #{tpu_custom_call.1} parent=1 // pred_region
      %s370 = ssub.s32 128, 128
      %371 = vsyncadd [#allocation4], %s370
      %s373 = sshll.u32 [#allocation10], 4
      %s374 = int_to_ptr.vmem [resolvable:$true] %s373
      %376 = dma.vmem_to_hbm [thread:$0]  %s374, 128, %s7, [#allocation4]
    $region49: #{tpu_custom_call.1} parent=1 // pred_fallthru
      _
    // Predicated region
    $region50: #{tpu_custom_call.1} parent=1 // pred_check
      _
    $region51: #{tpu_custom_call.1} parent=1 // pred_check_branch
      %378 = sbr.rel (0) target = $region53
    $region52: #{tpu_custom_call.1} parent=1 // pred_region
      %379 = dma.done [#allocation4], 128
    $region53: #{tpu_custom_call.1} parent=1 // pred_fallthru
      _
    %380 = vsyncpa [#allocation3], 1
    %381 = vsyncpa [#allocation6], 1
    %382 = vsyncpa [#allocation9], 1
    %383 = vsyncpa [#allocation4], 1

</llo_original>
